<compile_context>
chip_gen: v5e
topology: v5e:2x2
jax: 0.10.0
libtpu: 0.0.40
codegen_flags: <defaults>
</compile_context>

<pallas_src>
import jax
import jax.numpy as jnp
from jax.experimental import pallas as pl
from jax.experimental.pallas import tpu as pltpu


def latent_factor_kernel(uf_ref, itf_ref, uid_ref, iid_ref,
                         w_ref, b_ref, bu_ref, bi_ref, out_ref):
    # uf_ref / itf_ref : (H, Bblk)   features, batch on lanes
    # uid_ref / iid_ref: (1, Bblk)   int32 ids
    # w_ref            : (H, 1)      linear weight (pre-transposed)
    # b_ref            : (1, 1)      linear bias
    # bu_ref / bi_ref  : (U, 1) / (I, 1) bias tables
    # out_ref          : (1, Bblk)
    bblk = out_ref.shape[1]

    dot = uf_ref[...] * itf_ref[...]                                   # (H, Bblk)  VPU
    lin = jnp.sum(dot * w_ref[...], axis=0, keepdims=True) + b_ref[...]  # (1, Bblk)

    # b_user[user_id]: one-hot masked reduce over the small bias table (in-kernel gather).
    n_user = bu_ref.shape[0]
    urow = jax.lax.broadcasted_iota(jnp.int32, (n_user, bblk), 0)
    bu = jnp.sum(jnp.where(urow == uid_ref[...], bu_ref[...], 0.0),
                 axis=0, keepdims=True)                                # (1, Bblk)

    # b_item[item_id]
    n_item = bi_ref.shape[0]
    irow = jax.lax.broadcasted_iota(jnp.int32, (n_item, bblk), 0)
    bi = jnp.sum(jnp.where(irow == iid_ref[...], bi_ref[...], 0.0),
                 axis=0, keepdims=True)                                # (1, Bblk)

    out_ref[...] = lin + bu + bi


def latent_factor(user_feature, user_id, item_feature, item_id, params, *, block_b=None):
    """Returns predict of shape (B, 1), matching the PyTorch module."""
    B, H = user_feature.shape
    if block_b is None:
        # Single fat step unless the batch is large; chunks of 128 keep lane
        # alignment and give a >=2-long parallel grid axis for v7x megacore.
        block_b = B if B < 256 else 128
    n_chunks = pl.cdiv(B, block_b)
    Bp = n_chunks * block_b

    # Present the batch on the lane axis (lane-dense layout plumbing in the wrapper).
    uf_t = user_feature.astype(jnp.float32).T                 # (H, B)
    itf_t = item_feature.astype(jnp.float32).T                # (H, B)
    uid_t = user_id.reshape(1, B).astype(jnp.int32)           # (1, B)
    iid_t = item_id.reshape(1, B).astype(jnp.int32)           # (1, B)
    if Bp != B:
        pad = Bp - B
        uf_t = jnp.pad(uf_t, ((0, 0), (0, pad)))
        itf_t = jnp.pad(itf_t, ((0, 0), (0, pad)))
        uid_t = jnp.pad(uid_t, ((0, 0), (0, pad)))
        iid_t = jnp.pad(iid_t, ((0, 0), (0, pad)))

    w = params["linear_w"].reshape(1, H).T.astype(jnp.float32)    # (H, 1)
    b = params["linear_b"].reshape(1, 1).astype(jnp.float32)      # (1, 1)
    b_user = params["b_user"].reshape(-1, 1).astype(jnp.float32)  # (U, 1)
    b_item = params["b_item"].reshape(-1, 1).astype(jnp.float32)  # (I, 1)
    n_user = b_user.shape[0]
    n_item = b_item.shape[0]

    grid_spec = pltpu.PrefetchScalarGridSpec(
        num_scalar_prefetch=0,
        grid=(n_chunks,),
        in_specs=[
            pl.BlockSpec((H, block_b), lambda i: (0, i)),   # user_feature^T
            pl.BlockSpec((H, block_b), lambda i: (0, i)),   # item_feature^T
            pl.BlockSpec((1, block_b), lambda i: (0, i)),   # user_id
            pl.BlockSpec((1, block_b), lambda i: (0, i)),   # item_id
            pl.BlockSpec((H, 1), lambda i: (0, 0)),         # linear weight
            pl.BlockSpec((1, 1), lambda i: (0, 0)),         # linear bias
            pl.BlockSpec((n_user, 1), lambda i: (0, 0)),    # b_user table
            pl.BlockSpec((n_item, 1), lambda i: (0, 0)),    # b_item table
        ],
        out_specs=pl.BlockSpec((1, block_b), lambda i: (0, i)),
    )

    out = pl.pallas_call(
        latent_factor_kernel,
        out_shape=jax.ShapeDtypeStruct((1, Bp), jnp.float32),
        grid_spec=grid_spec,
        compiler_params=pltpu.CompilerParams(dimension_semantics=("parallel",)),
    )(uf_t, itf_t, uid_t, iid_t, w, b, b_user, b_item)

    return out.reshape(Bp, 1)[:B]                            # (B, 1)


def reference(user_feature, user_id, item_feature, item_id, params):
    """Pure-JAX mirror of the PyTorch forward."""
    H = user_feature.shape[1]
    dot = user_feature * item_feature
    lin = dot @ params["linear_w"].reshape(1, H).T + params["linear_b"].reshape(1, 1)
    bu = params["b_user"][user_id[:, 0]][:, None]
    bi = params["b_item"][item_id[:, 0]][:, None]
    return lin + bu + bi


if __name__ == "__main__":
    # opt = {'hidden_size': 32}; small user/item tables.
    B, H = 2, 32
    USER_NUMS, ITEM_NUMS = 11, 17

    key = jax.random.PRNGKey(0)
    keys = jax.random.split(key, 8)

    params = {
        "linear_w": 0.1 * jax.random.normal(keys[0], (1, H), jnp.float32),   # torch Linear weight (1, H)
        "linear_b": 0.1 * jax.random.normal(keys[1], (1,), jnp.float32),
        "b_user": jax.random.normal(keys[2], (USER_NUMS,), jnp.float32),
        "b_item": jax.random.normal(keys[3], (ITEM_NUMS,), jnp.float32),
    }
    user_feature = jax.random.normal(keys[4], (B, H), jnp.float32)
    item_feature = jax.random.normal(keys[5], (B, H), jnp.float32)
    user_id = jax.random.randint(keys[6], (B, 1), 0, USER_NUMS)
    item_id = jax.random.randint(keys[7], (B, 1), 0, ITEM_NUMS)

    predict = latent_factor(user_feature, user_id, item_feature, item_id, params)
    predict = jax.block_until_ready(predict)

    predict_ref = reference(user_feature, user_id, item_feature, item_id, params)
    assert predict.shape == (B, 1), f"bad shape {predict.shape}"
    assert jnp.allclose(predict, predict_ref, atol=1e-5, rtol=1e-5), "prediction mismatch"

    print("KERNEL_OK")
</pallas_src>

<mosaic_0001>
module attributes {stable_mosaic.version = 11 : i64} {
  func.func @latent_factor_kernel(%arg0: i32, %arg1: memref<32x2xf32, #tpu.memory_space<vmem>>, %arg2: memref<32x2xf32, #tpu.memory_space<vmem>>, %arg3: memref<1x2xi32, #tpu.memory_space<vmem>>, %arg4: memref<1x2xi32, #tpu.memory_space<vmem>>, %arg5: memref<32x1xf32, #tpu.memory_space<vmem>>, %arg6: memref<1x1xf32, #tpu.memory_space<vmem>>, %arg7: memref<11x1xf32, #tpu.memory_space<vmem>>, %arg8: memref<17x1xf32, #tpu.memory_space<vmem>>, %arg9: memref<1x2xf32, #tpu.memory_space<vmem>>) attributes {dimension_semantics = [#tpu.dimension_semantics<parallel>], iteration_bounds = array<i64: 1>, scalar_prefetch = 0 : i64, scratch_operands = 0 : i64, tpu.core_type = #tpu.core_type<tc>, window_params = [{transform_indices = @transform_0, window_bounds = array<i64: 32, 2>}, {transform_indices = @transform_1, window_bounds = array<i64: 32, 2>}, {transform_indices = @transform_2, window_bounds = array<i64: 1, 2>}, {transform_indices = @transform_3, window_bounds = array<i64: 1, 2>}, {pipeline_mode = #tpu.pipeline_mode<synchronous>, transform_indices = @transform_4, window_bounds = array<i64: 32, 1>}, {pipeline_mode = #tpu.pipeline_mode<synchronous>, transform_indices = @transform_5, window_bounds = array<i64: 1, 1>}, {pipeline_mode = #tpu.pipeline_mode<synchronous>, transform_indices = @transform_6, window_bounds = array<i64: 11, 1>}, {pipeline_mode = #tpu.pipeline_mode<synchronous>, transform_indices = @transform_7, window_bounds = array<i64: 17, 1>}, {transform_indices = @transform_8, window_bounds = array<i64: 1, 2>}]} {
    %c0 = arith.constant 0 : index
    %c0_0 = arith.constant 0 : index
    %0 = vector.load %arg1[%c0, %c0_0] : memref<32x2xf32, #tpu.memory_space<vmem>>, vector<32x2xf32>
    %c0_1 = arith.constant 0 : index
    %c0_2 = arith.constant 0 : index
    %1 = vector.load %arg2[%c0_1, %c0_2] : memref<32x2xf32, #tpu.memory_space<vmem>>, vector<32x2xf32>
    %2 = arith.mulf %0, %1 : vector<32x2xf32>
    %c0_3 = arith.constant 0 : index
    %c0_4 = arith.constant 0 : index
    %3 = vector.load %arg5[%c0_3, %c0_4] : memref<32x1xf32, #tpu.memory_space<vmem>>, vector<32x1xf32>
    %4 = vector.broadcast %3 : vector<32x1xf32> to vector<32x2xf32>
    %5 = arith.mulf %2, %4 : vector<32x2xf32>
    %cst = arith.constant dense<0.000000e+00> : vector<2xf32>
    %6 = vector.multi_reduction <add>, %5, %cst [0] : vector<32x2xf32> to vector<2xf32>
    %7 = vector.shape_cast %6 : vector<2xf32> to vector<1x2xf32>
    %c0_5 = arith.constant 0 : index
    %c0_6 = arith.constant 0 : index
    %8 = vector.load %arg6[%c0_5, %c0_6] : memref<1x1xf32, #tpu.memory_space<vmem>>, vector<1x1xf32>
    %9 = vector.broadcast %8 : vector<1x1xf32> to vector<1x2xf32>
    %10 = arith.addf %7, %9 : vector<1x2xf32>
    %11 = tpu.iota {dimensions = array<i32: 0>} : vector<11x2xi32>
    %c0_7 = arith.constant 0 : index
    %c0_8 = arith.constant 0 : index
    %12 = vector.load %arg3[%c0_7, %c0_8] : memref<1x2xi32, #tpu.memory_space<vmem>>, vector<1x2xi32>
    %13 = vector.broadcast %12 : vector<1x2xi32> to vector<11x2xi32>
    %14 = arith.cmpi eq, %11, %13 : vector<11x2xi32>
    %c0_9 = arith.constant 0 : index
    %c0_10 = arith.constant 0 : index
    %15 = vector.load %arg7[%c0_9, %c0_10] : memref<11x1xf32, #tpu.memory_space<vmem>>, vector<11x1xf32>
    %cst_11 = arith.constant 0.000000e+00 : f32
    %16 = vector.shape_cast %15 : vector<11x1xf32> to vector<11x1xf32>
    %17 = vector.broadcast %16 : vector<11x1xf32> to vector<11x2xf32>
    %18 = vector.broadcast %cst_11 : f32 to vector<11x2xf32>
    %19 = arith.select %14, %17, %18 : vector<11x2xi1>, vector<11x2xf32>
    %cst_12 = arith.constant dense<0.000000e+00> : vector<2xf32>
    %20 = vector.multi_reduction <add>, %19, %cst_12 [0] : vector<11x2xf32> to vector<2xf32>
    %21 = vector.shape_cast %20 : vector<2xf32> to vector<1x2xf32>
    %22 = tpu.iota {dimensions = array<i32: 0>} : vector<17x2xi32>
    %c0_13 = arith.constant 0 : index
    %c0_14 = arith.constant 0 : index
    %23 = vector.load %arg4[%c0_13, %c0_14] : memref<1x2xi32, #tpu.memory_space<vmem>>, vector<1x2xi32>
    %24 = vector.broadcast %23 : vector<1x2xi32> to vector<17x2xi32>
    %25 = arith.cmpi eq, %22, %24 : vector<17x2xi32>
    %c0_15 = arith.constant 0 : index
    %c0_16 = arith.constant 0 : index
    %26 = vector.load %arg8[%c0_15, %c0_16] : memref<17x1xf32, #tpu.memory_space<vmem>>, vector<17x1xf32>
    %cst_17 = arith.constant 0.000000e+00 : f32
    %27 = vector.shape_cast %26 : vector<17x1xf32> to vector<17x1xf32>
    %28 = vector.broadcast %27 : vector<17x1xf32> to vector<17x2xf32>
    %29 = vector.broadcast %cst_17 : f32 to vector<17x2xf32>
    %30 = arith.select %25, %28, %29 : vector<17x2xi1>, vector<17x2xf32>
    %cst_18 = arith.constant dense<0.000000e+00> : vector<2xf32>
    %31 = vector.multi_reduction <add>, %30, %cst_18 [0] : vector<17x2xf32> to vector<2xf32>
    %32 = vector.shape_cast %31 : vector<2xf32> to vector<1x2xf32>
    %33 = arith.addf %10, %21 : vector<1x2xf32>
    %34 = arith.addf %33, %32 : vector<1x2xf32>
    %c0_19 = arith.constant 0 : index
    %c0_20 = arith.constant 0 : index
    %35 = vector.load %arg9[%c0_19, %c0_20] : memref<1x2xf32, #tpu.memory_space<vmem>>, vector<1x2xf32>
    tpu.vector_store %arg9[%c0_19, %c0_20], %34 {strides = array<i32>} : memref<1x2xf32, #tpu.memory_space<vmem>>, vector<1x2xf32>,
    return
  }
  func.func @transform_0(%arg0: i32) -> (i32, i32) {
    %c0_i32 = arith.constant 0 : i32
    %c0_i32_0 = arith.constant 0 : i32
    return %c0_i32, %arg0 : i32, i32
  }
  func.func @transform_1(%arg0: i32) -> (i32, i32) {
    %c0_i32 = arith.constant 0 : i32
    %c0_i32_0 = arith.constant 0 : i32
    return %c0_i32, %arg0 : i32, i32
  }
  func.func @transform_2(%arg0: i32) -> (i32, i32) {
    %c0_i32 = arith.constant 0 : i32
    %c0_i32_0 = arith.constant 0 : i32
    return %c0_i32, %arg0 : i32, i32
  }
  func.func @transform_3(%arg0: i32) -> (i32, i32) {
    %c0_i32 = arith.constant 0 : i32
    %c0_i32_0 = arith.constant 0 : i32
    return %c0_i32, %arg0 : i32, i32
  }
  func.func @transform_4(%arg0: i32) -> (i32, i32) {
    %c0_i32 = arith.constant 0 : i32
    %c0_i32_0 = arith.constant 0 : i32
    %c0_i32_1 = arith.constant 0 : i32
    return %c0_i32, %c0_i32_0 : i32, i32
  }
  func.func @transform_5(%arg0: i32) -> (i32, i32) {
    %c0_i32 = arith.constant 0 : i32
    %c0_i32_0 = arith.constant 0 : i32
    %c0_i32_1 = arith.constant 0 : i32
    return %c0_i32, %c0_i32_0 : i32, i32
  }
  func.func @transform_6(%arg0: i32) -> (i32, i32) {
    %c0_i32 = arith.constant 0 : i32
    %c0_i32_0 = arith.constant 0 : i32
    %c0_i32_1 = arith.constant 0 : i32
    return %c0_i32, %c0_i32_0 : i32, i32
  }
  func.func @transform_7(%arg0: i32) -> (i32, i32) {
    %c0_i32 = arith.constant 0 : i32
    %c0_i32_0 = arith.constant 0 : i32
    %c0_i32_1 = arith.constant 0 : i32
    return %c0_i32, %c0_i32_0 : i32, i32
  }
  func.func @transform_8(%arg0: i32) -> (i32, i32) {
    %c0_i32 = arith.constant 0 : i32
    %c0_i32_0 = arith.constant 0 : i32
    return %c0_i32, %arg0 : i32, i32
  }
}

</mosaic_0001>

<llo_original>
// kernel: tpu_custom_call.1
$region0: #{tpu_custom_call.1}
  #allocation0 [shape = 'u32[]', space=smem, size = 0x4, offset = 0x4, fixed_abs, tag = 'smem constant byte address 0x4 - core index']
  #allocation1 [shape = 'u32[72,128]{1,0:T(1,128)}', space=vmem, size = 0x9000, scoped, tag = 'internal scratch']
  #allocation2 [shape = 'f32[1,1]{1,0:T(1,128)S(1)}', space=vmem, size = 0x200, scoped, tag = 'scoped memory for tpu_custom_call.1']
  %s0 = inlined_call_operand.vmem [shape: f32[32,2], index: 0, kind: input, shape index: {}]
  %s1 = inlined_call_operand.vmem [shape: f32[32,2], index: 1, kind: input, shape index: {}]
  %s2 = inlined_call_operand.vmem [shape: s32[1,2], index: 2, kind: input, shape index: {}]
  %s3 = inlined_call_operand.vmem [shape: s32[1,2], index: 3, kind: input, shape index: {}]
  %s4 = inlined_call_operand.vmem [shape: f32[32,1], index: 4, kind: input, shape index: {}]
  %s5 = inlined_call_operand.<no memory space> [shape: f32[1,1], index: 5, kind: input, shape index: {}]
  %s6 = inlined_call_operand.vmem [shape: f32[11,1], index: 6, kind: input, shape index: {}]
  %s7 = inlined_call_operand.vmem [shape: f32[17,1], index: 7, kind: input, shape index: {}]
  %s8 = inlined_call_operand.hbm [shape: f32[1,2], index: 8, kind: output, shape index: {}]
  %s9 = sld [smem:[#allocation0]]
  $region42: #{tpu_custom_call.1} parent=0
    _
  %s11 = ssub.s32 1, %s9
  %s12 = scalar_select 0, %s11, %s9
  %v13 = vstv %s5
  %14 = vst [vmem:[#allocation2] sm:$0x1] %v13
  $region1: #{tpu_custom_call.1} parent=0
    #allocation3 [shape = 'u8[512]{0}', space=vmem, size = 0x400, scoped, tag = 'output window, operand 0, single buffered']
    #allocation4 [shape = 's32[1]{0}', space=sflag, size = 0x4, scoped, tag = 'scoped memory for tpu_custom_call.1']
    %15 = vsyncpa [#allocation4], 0
    // Predicated region
    $region2: #{tpu_custom_call.1} parent=1 // pred_check
      _
    $region3: #{tpu_custom_call.1} parent=1 // pred_check_branch
      %17 = sbr.rel (0) target = $region5
    $region4: #{tpu_custom_call.1} parent=1 // pred_region
      _
    $region5: #{tpu_custom_call.1} parent=1 // pred_fallthru
      _
    // Predicated region
    $region6: #{tpu_custom_call.1} parent=1 // pred_check
      _
    $region7: #{tpu_custom_call.1} parent=1 // pred_check_branch
      %19 = sbr.rel (0) target = $region9
    $region8: #{tpu_custom_call.1} parent=1 // pred_region
      _
    $region9: #{tpu_custom_call.1} parent=1 // pred_fallthru
      _
    // Predicated region
    $region10: #{tpu_custom_call.1} parent=1 // pred_check
      _
    $region11: #{tpu_custom_call.1} parent=1 // pred_check_branch
      %21 = sbr.rel (0) target = $region13
    $region12: #{tpu_custom_call.1} parent=1 // pred_region
      _
    $region13: #{tpu_custom_call.1} parent=1 // pred_fallthru
      _
    // Predicated region
    $region14: #{tpu_custom_call.1} parent=1 // pred_check
      _
    $region15: #{tpu_custom_call.1} parent=1 // pred_check_branch
      %23 = sbr.rel (0) target = $region17
    $region16: #{tpu_custom_call.1} parent=1 // pred_region
      _
    $region17: #{tpu_custom_call.1} parent=1 // pred_fallthru
      _
    // Predicated region
    $region18: #{tpu_custom_call.1} parent=1 // pred_check
      _
    $region19: #{tpu_custom_call.1} parent=1 // pred_check_branch
      %25 = sbr.rel (0) target = $region21
    $region20: #{tpu_custom_call.1} parent=1 // pred_region
      _
    $region21: #{tpu_custom_call.1} parent=1 // pred_fallthru
      _
    // Predicated region
    $region22: #{tpu_custom_call.1} parent=1 // pred_check
      _
    $region23: #{tpu_custom_call.1} parent=1 // pred_check_branch
      %27 = sbr.rel (0) target = $region25
    $region24: #{tpu_custom_call.1} parent=1 // pred_region
      _
    $region25: #{tpu_custom_call.1} parent=1 // pred_fallthru
      _
    // Predicated region
    $region26: #{tpu_custom_call.1} parent=1 // pred_check
      _
    $region27: #{tpu_custom_call.1} parent=1 // pred_check_branch
      %29 = sbr.rel (0) target = $region29
    $region28: #{tpu_custom_call.1} parent=1 // pred_region
      _
    $region29: #{tpu_custom_call.1} parent=1 // pred_fallthru
      _
    // Predicated region
    $region30: #{tpu_custom_call.1} parent=1 // pred_check
      _
    $region31: #{tpu_custom_call.1} parent=1 // pred_check_branch
      %31 = sbr.rel (0) target = $region33
    $region32: #{tpu_custom_call.1} parent=1 // pred_region
      _
    $region33: #{tpu_custom_call.1} parent=1 // pred_fallthru
      _
    %v32 = vld [vmem:[%s0] sm:$0xff]
    %v33 = vld [vmem:[%s0 + $0x8] sm:$0xff]
    %v34 = vld [vmem:[%s0 + $0x10] sm:$0xff]
    %v35 = vld [vmem:[%s0 + $0x18] sm:$0xff]
    %v36 = vld [vmem:[%s1] sm:$0xff]
    %v37 = vld [vmem:[%s1 + $0x8] sm:$0xff]
    %v38 = vld [vmem:[%s1 + $0x10] sm:$0xff]
    %v39 = vld [vmem:[%s1 + $0x18] sm:$0xff]
    %v40 = vmul.f32 %v32, %v36
    %v41 = vmul.f32 %v33, %v37
    %v42 = vmul.f32 %v34, %v38
    %v43 = vmul.f32 %v35, %v39
    %v44 = vld [vmem:[%s4] sm:$0xff]
    %v45 = vld [vmem:[%s4 + $0x8] sm:$0xff]
    %v46 = vld [vmem:[%s4 + $0x10] sm:$0xff]
    %v47 = vld [vmem:[%s4 + $0x18] sm:$0xff]
    %49 = vset.pattern.permute.xlu0 0
    %50 = vperm.xlu0 %49, %v44
    %v51 = vpop.permute.xlu0 %50
    %54 = vset.pattern.permute.xlu0 0
    %55 = vperm.xlu0 %54, %v45
    %v56 = vpop.permute.xlu0 %55
    %59 = vset.pattern.permute.xlu0 0
    %60 = vperm.xlu0 %59, %v46
    %v61 = vpop.permute.xlu0 %60
    %64 = vset.pattern.permute.xlu0 0
    %65 = vperm.xlu0 %64, %v47
    %v66 = vpop.permute.xlu0 %65
    %v68 = vmul.f32 %v40, %v51
    %v69 = vmul.f32 %v41, %v56
    %v70 = vmul.f32 %v42, %v61
    %v71 = vmul.f32 %v43, %v66
    %vm72 = vcmask 15360
    %v73 = vsel %vm72, %v68, 0.0
    %v74 = vsel %vm72, %v69, 0.0
    %v75 = vadd.f32 %v73, %v74
    %v76 = vsel %vm72, %v70, 0.0
    %v77 = vadd.f32 %v75, %v76
    %v78 = vsel %vm72, %v71, 0.0
    %v79 = vadd.f32 %v77, %v78
    %v80 = vrot.slane %v79, 4
    %v81 = vadd.f32 %v79, %v80
    %v82 = vrot.slane %v81, 2
    %v83 = vadd.f32 %v81, %v82
    %v84 = vrot.slane %v83, 1
    %v85 = vadd.f32 %v83, %v84
    %v86 = vld [vmem:[#allocation2] sm:$0x1]
    %88 = vset.pattern.permute.xlu0 0
    %89 = vperm.xlu0 %88, %v86
    %v90 = vpop.permute.xlu0 %89
    %v92 = vperm.slane %v90, 0
    %v93 = vadd.f32 %v85, %v92
    %v94 = vlaneseq
    %v95 = vshrl.u32 %v94, 7
    %v96 = vadd.s32 %v95, 8
    %v97 = vld [vmem:[%s2] sm:$0x1]
    %v98 = vperm.slane %v97, 0
    %vm99 = vcmp.eq.s32.totalorder %v95, %v98
    %vm100 = vcmp.eq.s32.totalorder %v96, %v98
    %v101 = vld [vmem:[%s6] sm:$0xff]
    %v102 = vld [vmem:[%s6 + $0x8] sm:$0x7]
    %104 = vset.pattern.permute.xlu0 0
    %105 = vperm.xlu0 %104, %v101
    %v106 = vpop.permute.xlu0 %105
    %109 = vset.pattern.permute.xlu0 0
    %110 = vperm.xlu0 %109, %v102
    %v111 = vpop.permute.xlu0 %110
    %v113 = vsel %vm99, %v106, 0.0
    %v114 = vsel %vm100, %v111, 0.0
    %v115 = vsel %vm72, %v113, 0.0
    %vm116 = vcmask 10240
    %v117 = vsel %vm116, %v114, 0.0
    %v118 = vadd.f32 %v115, %v117
    %v119 = vrot.slane %v118, 4
    %v120 = vadd.f32 %v118, %v119
    %v121 = vrot.slane %v120, 2
    %v122 = vadd.f32 %v120, %v121
    %v123 = vrot.slane %v122, 1
    %v124 = vadd.f32 %v122, %v123
    %v125 = vadd.s32 %v95, 16
    %v126 = vld [vmem:[%s3] sm:$0x1]
    %v127 = vperm.slane %v126, 0
    %vm128 = vcmp.eq.s32.totalorder %v95, %v127
    %vm129 = vcmp.eq.s32.totalorder %v96, %v127
    %vm130 = vcmp.eq.s32.totalorder %v125, %v127
    %v131 = vld [vmem:[%s7] sm:$0xff]
    %v132 = vld [vmem:[%s7 + $0x8] sm:$0xff]
    %v133 = vld [vmem:[%s7 + $0x10] sm:$0x1]
    %135 = vset.pattern.permute.xlu0 0
    %136 = vperm.xlu0 %135, %v131
    %v137 = vpop.permute.xlu0 %136
    %140 = vset.pattern.permute.xlu0 0
    %141 = vperm.xlu0 %140, %v132
    %v142 = vpop.permute.xlu0 %141
    %145 = vset.pattern.permute.xlu0 0
    %146 = vperm.xlu0 %145, %v133
    %v147 = vpop.permute.xlu0 %146
    %v149 = vsel %vm128, %v137, 0.0
    %v150 = vsel %vm129, %v142, 0.0
    %v151 = vsel %vm130, %v147, 0.0
    %v152 = vsel %vm72, %v149, 0.0
    %v153 = vsel %vm72, %v150, 0.0
    %v154 = vadd.f32 %v152, %v153
    %vm155 = vcmask 8192
    %v156 = vsel %vm155, %v151, 0.0
    %v157 = vadd.f32 %v154, %v156
    %v158 = vrot.slane %v157, 4
    %v159 = vadd.f32 %v157, %v158
    %v160 = vrot.slane %v159, 2
    %v161 = vadd.f32 %v159, %v160
    %v162 = vrot.slane %v161, 1
    %v163 = vadd.f32 %v161, %v162
    %v164 = vadd.f32 %v93, %v124
    %v165 = vadd.f32 %v164, %v163
    %166 = vst.msk [vmem:[#allocation3] sm:$0x1] %vm155, %v165
    // Predicated region
    $region34: #{tpu_custom_call.1} parent=1 // pred_check
      _
    $region35: #{tpu_custom_call.1} parent=1 // pred_check_branch
      %168 = sbr.rel (0) target = $region37
    $region36: #{tpu_custom_call.1} parent=1 // pred_region
      %170 = vsyncadd [#allocation4], 0
      %s172 = sshll.u32 [#allocation3], 4
      %s173 = int_to_ptr.vmem [resolvable:$true] %s172
      %s174 = sshll.u32 %s8, 4
      %s175 = int_to_ptr.hbm [resolvable:$true] %s174
      %177 = dma.vmem_to_hbm [thread:$0]  %s173, 16, %s175, [#allocation4]
    $region37: #{tpu_custom_call.1} parent=1 // pred_fallthru
      _
    // Predicated region
    $region38: #{tpu_custom_call.1} parent=1 // pred_check
      _
    $region39: #{tpu_custom_call.1} parent=1 // pred_check_branch
      %179 = sbr.rel (0) target = $region41
    $region40: #{tpu_custom_call.1} parent=1 // pred_region
      %181 = dma.done [#allocation4], 16
    $region41: #{tpu_custom_call.1} parent=1 // pred_fallthru
      _
    %182 = vsyncpa [#allocation4], 1

</llo_original>
